<compile_context>
chip_gen: v6e
topology: v6e:2x2x1
jax: 0.10.0
libtpu: 0.0.40
codegen_flags: <defaults>
</compile_context>

<pallas_src>
import functools

import jax
import jax.numpy as jnp
from jax.experimental import pallas as pl
from jax.experimental.pallas import tpu as pltpu


def _conv1d_kernel(x_ref, w_ref, b_ref, o_ref, xpad_ref, *,
                   seq_len, pad, kernel_size, dilation, stride,
                   tile_l, pad_len, compute_dtype):
    """One (batch, seq-tile) grid step.

    x_ref   : (S, C_in)         unpadded input, resident across seq tiles
    w_ref   : (K*C_in, C_out)   flattened taps, resident across the grid
    b_ref   : (1, C_out)        bias (zeros when the module has bias=False)
    o_ref   : (TILE_L, C_out)   output tile
    xpad_ref: (pad_len, C_in)   zero-padded copy of x (VMEM scratch)
    """
    t = pl.program_id(1)
    c_in = x_ref.shape[1]

    # (Re)build the zero-padded sequence once per batch element (tile 0).
    @pl.when(t == 0)
    def _fill_padded():
        if pad > 0:
            xpad_ref[0:pad, :] = jnp.zeros((pad, c_in), xpad_ref.dtype)
        tail = pad_len - (pad + seq_len)
        if tail > 0:
            xpad_ref[pad + seq_len:pad_len, :] = jnp.zeros((tail, c_in),
                                                           xpad_ref.dtype)
        xpad_ref[pad:pad + seq_len, :] = x_ref[...]

    win_rows = (tile_l - 1) * stride + 1               # rows feeding one tile
    win_total = win_rows + (kernel_size - 1) * dilation
    base = t * (tile_l * stride)
    if (tile_l * stride) % 8 == 0:
        base = pl.multiple_of(base, 8)                 # sublane-aligned window

    window = xpad_ref[pl.ds(base, win_total), :]       # (win_total, C_in)

    # im2col: K shifted views concatenated along channels, so the whole conv
    # is a single MXU matmul with contraction depth K*C_in.
    cols = [window[k * dilation:k * dilation + win_rows, :]
            for k in range(kernel_size)]
    lhs = cols[0] if kernel_size == 1 else jnp.concatenate(cols, axis=1)
    if stride > 1:
        lhs = lhs[::stride]                            # (TILE_L, K*C_in)

    acc = jnp.dot(lhs.astype(compute_dtype), w_ref[...],
                  preferred_element_type=jnp.float32)
    acc = acc + b_ref[...].astype(jnp.float32)         # fused bias epilogue
    o_ref[...] = acc.astype(o_ref.dtype)


def cnn_layer_forward(x, weight, *, stride=1, dilation=1, padding=None,
                      bias=None, lengths=None, compute_dtype=None,
                      max_tile_l=512):
    """Pallas equivalent of CNNLayer.forward.

    x:      (B, S, C_in)      — layout the PyTorch module receives.
    weight: (C_out, C_in, K)  — nn.Conv1d weight layout.
    """
    B, S, C_in = x.shape
    C_out, c_in_w, K = weight.shape
    assert c_in_w == C_in, (c_in_w, C_in)
    if padding is None:
        # Module default (truncates for even kernel sizes, same as PyTorch code).
        padding = int(dilation * (K - 1) / 2)
    if compute_dtype is None:
        compute_dtype = x.dtype

    # PyTorch Conv1d output length.
    L_out = (S + 2 * padding - dilation * (K - 1) - 1) // stride + 1
    assert L_out >= 1, "kernel/dilation too large for this sequence length"

    # Sequence tile: as large as the VMEM budget allows (overhead dominates
    # below ~512-wide tiles); re-derive max_tile_l downward for v7x (64 MiB).
    if L_out <= max_tile_l:
        tile_l, n_tiles = L_out, 1
    else:
        tile_l = max(8, (max_tile_l // 8) * 8)         # sublane-aligned
        n_tiles = pl.cdiv(L_out, tile_l)

    # Padded-scratch length: must cover the last tile's read window and the
    # copied real data.
    read_need = (n_tiles * tile_l - 1) * stride + dilation * (K - 1) + 1
    pad_len = max(read_need, padding + S)

    # (C_out, C_in, K) -> (K*C_in, C_out); row k*C_in + c  <->  weight[:, c, k].
    w_flat = (jnp.transpose(weight, (2, 1, 0))
              .reshape(K * C_in, C_out).astype(compute_dtype))
    if bias is None:
        bias2d = jnp.zeros((1, C_out), jnp.float32)
    else:
        bias2d = jnp.asarray(bias, jnp.float32).reshape(1, C_out)

    kernel = functools.partial(
        _conv1d_kernel, seq_len=S, pad=padding, kernel_size=K,
        dilation=dilation, stride=stride, tile_l=tile_l, pad_len=pad_len,
        compute_dtype=compute_dtype)

    itm = jnp.dtype(x.dtype).itemsize
    csz = jnp.dtype(compute_dtype).itemsize
    vmem_bytes = (2 * S * C_in * itm                   # input (double-buffered)
                  + pad_len * C_in * itm               # padded scratch
                  + 2 * K * C_in * C_out * csz         # weight
                  + 2 * tile_l * C_out * itm           # output (double-buffered)
                  + tile_l * (K * C_in + 2 * C_out) * 4)   # im2col + f32 acc
    # >= 32 MiB scoped default, capped at v7x's 64 MiB physical VMEM.
    vmem_limit = int(min(max(2 * vmem_bytes, 32 * 2**20), 64 * 2**20))

    out = pl.pallas_call(
        kernel,
        out_shape=jax.ShapeDtypeStruct((B, L_out, C_out), x.dtype),
        grid_spec=pltpu.PrefetchScalarGridSpec(
            num_scalar_prefetch=0,
            grid=(B, n_tiles),
            in_specs=[
                # Whole unpadded sequence of one batch element; index_map
                # ignores the tile axis so the block stays resident across
                # that batch element's seq tiles.
                pl.BlockSpec((None, S, C_in), lambda b, t: (b, 0, 0)),
                # Flattened weight: resident across the whole grid.
                pl.BlockSpec((K * C_in, C_out), lambda b, t: (0, 0)),
                pl.BlockSpec((1, C_out), lambda b, t: (0, 0)),
            ],
            out_specs=pl.BlockSpec((None, tile_l, C_out),
                                   lambda b, t: (b, t, 0)),
            scratch_shapes=[pltpu.VMEM((pad_len, C_in), x.dtype)],
        ),
        compiler_params=pltpu.CompilerParams(
            # The seq-tile axis must stay "arbitrary": tile 0 fills the padded
            # scratch that later tiles of the same batch element reuse.
            dimension_semantics=("parallel", "arbitrary"),
            vmem_limit_bytes=vmem_limit),
    )(x, w_flat, bias2d)

    if lengths is not None:
        # x[torch.arange(B), lengths] (JAX clamps OOB indices; torch raises).
        out = out[jnp.arange(B), lengths]
    return out


if __name__ == "__main__":
    key = jax.random.PRNGKey(0)
    k_x, k_w = jax.random.split(key)

    # CNNLayer(input_dim=32, output_dim=32, kind='1D', kernel_size=5,
    #          dilation=1, stride=1, bias=False)  -> padding = 2.
    B, S, C_in, C_out, K = 2, 16, 32, 32, 5
    x = jax.random.normal(k_x, (B, S, C_in), dtype=jnp.float32)
    bound = 1.0 / (C_in * K) ** 0.5            # nn.Conv1d default init range
    w = jax.random.uniform(k_w, (C_out, C_in, K), minval=-bound, maxval=bound,
                           dtype=jnp.float32)

    out = jax.block_until_ready(cnn_layer_forward(x, w))

    # Reference: plain JAX 1D conv (same padding, stride 1, no bias).
    ref = jax.lax.conv_general_dilated(
        x, jnp.transpose(w, (2, 1, 0)),
        window_strides=(1,), padding=[(2, 2)], rhs_dilation=(1,),
        dimension_numbers=("NWC", "WIO", "NWC"))

    assert out.shape == (B, S, C_out), out.shape
    # Default TPU matmul precision uses bf16 passes -> modest tolerance.
    assert jnp.allclose(out, ref, atol=2e-2, rtol=2e-2), float(
        jnp.max(jnp.abs(out - ref)))

    # bf16-compute path (f32 accumulation) exercised with loose tolerance.
    out_bf16 = jax.block_until_ready(
        cnn_layer_forward(x, w, compute_dtype=jnp.bfloat16))
    assert out_bf16.shape == (B, S, C_out)
    assert jnp.allclose(out_bf16, ref, atol=1e-1, rtol=1e-1)

    # Optional `lengths` path: out[arange(B), lengths].
    lengths = jnp.array([3, 7], dtype=jnp.int32)
    out_len = jax.block_until_ready(cnn_layer_forward(x, w, lengths=lengths))
    ref_len = ref[jnp.arange(B), lengths]
    assert out_len.shape == (B, C_out), out_len.shape
    assert jnp.allclose(out_len, ref_len, atol=2e-2, rtol=2e-2)

    print("KERNEL_OK")
</pallas_src>

<mosaic_0001>
module attributes {stable_mosaic.version = 11 : i64} {
  func.func @_conv1d_kernel(%arg0: i32, %arg1: i32, %arg2: memref<1x16x32xf32, #tpu.memory_space<vmem>>, %arg3: memref<160x32xf32, #tpu.memory_space<vmem>>, %arg4: memref<1x32xf32, #tpu.memory_space<vmem>>, %arg5: memref<1x16x32xf32, #tpu.memory_space<vmem>>, %arg6: memref<20x32xf32, #tpu.memory_space<vmem>>) attributes {dimension_semantics = [#tpu.dimension_semantics<parallel>, #tpu.dimension_semantics<arbitrary>], iteration_bounds = array<i64: 2, 1>, scalar_prefetch = 0 : i64, scratch_operands = 1 : i64, tpu.core_type = #tpu.core_type<tc>, window_params = [{transform_indices = @transform_0, window_bounds = array<i64: 1, 16, 32>}, {pipeline_mode = #tpu.pipeline_mode<synchronous>, transform_indices = @transform_1, window_bounds = array<i64: 160, 32>}, {pipeline_mode = #tpu.pipeline_mode<synchronous>, transform_indices = @transform_2, window_bounds = array<i64: 1, 32>}, {transform_indices = @transform_3, window_bounds = array<i64: 1, 16, 32>}]} {
    %c0_i32 = arith.constant 0 : i32
    %0 = arith.cmpi eq, %arg1, %c0_i32 : i32
    %1 = arith.extui %0 : i1 to i32
    %c0_i32_0 = arith.constant 0 : i32
    %2 = arith.cmpi ne, %1, %c0_i32_0 : i32
    scf.if %2 {
      %cst_8 = arith.constant 0.000000e+00 : f32
      %21 = vector.broadcast %cst_8 : f32 to vector<2x32xf32>
      %c0_9 = arith.constant 0 : index
      %c0_10 = arith.constant 0 : index
      %22 = vector.load %arg6[%c0_9, %c0_10] : memref<20x32xf32, #tpu.memory_space<vmem>>, vector<2x32xf32>
      tpu.vector_store %arg6[%c0_9, %c0_10], %21 {strides = array<i32>} : memref<20x32xf32, #tpu.memory_space<vmem>>, vector<2x32xf32>,
      %cst_11 = arith.constant 0.000000e+00 : f32
      %23 = vector.broadcast %cst_11 : f32 to vector<2x32xf32>
      %c18 = arith.constant 18 : index
      %c0_12 = arith.constant 0 : index
      %24 = vector.load %arg6[%c18, %c0_12] : memref<20x32xf32, #tpu.memory_space<vmem>>, vector<2x32xf32>
      tpu.vector_store %arg6[%c18, %c0_12], %23 {strides = array<i32>} : memref<20x32xf32, #tpu.memory_space<vmem>>, vector<2x32xf32>,
      %c0_13 = arith.constant 0 : index
      %c0_14 = arith.constant 0 : index
      %c0_15 = arith.constant 0 : index
      %25 = vector.load %arg2[%c0_13, %c0_14, %c0_15] : memref<1x16x32xf32, #tpu.memory_space<vmem>>, vector<1x16x32xf32>
      %26 = vector.shape_cast %25 : vector<1x16x32xf32> to vector<16x32xf32>
      %c2 = arith.constant 2 : index
      %c0_16 = arith.constant 0 : index
      %27 = vector.load %arg6[%c2, %c0_16] : memref<20x32xf32, #tpu.memory_space<vmem>>, vector<16x32xf32>
      tpu.vector_store %arg6[%c2, %c0_16], %26 {strides = array<i32>} : memref<20x32xf32, #tpu.memory_space<vmem>>, vector<16x32xf32>,
    } else {
    }
    %c16_i32 = arith.constant 16 : i32
    %3 = arith.muli %arg1, %c16_i32 : i32
    %4 = tpu.assume_multiple %3, 8 : i32
    %5 = arith.index_cast %4 : i32 to index
    %c0 = arith.constant 0 : index
    %6 = vector.load %arg6[%5, %c0] : memref<20x32xf32, #tpu.memory_space<vmem>>, vector<20x32xf32>
    %7 = vector.extract_strided_slice %6 {offsets = [0, 0], sizes = [16, 32], strides = [1, 1]} : vector<20x32xf32> to vector<16x32xf32>
    %8 = vector.extract_strided_slice %6 {offsets = [1, 0], sizes = [16, 32], strides = [1, 1]} : vector<20x32xf32> to vector<16x32xf32>
    %9 = vector.extract_strided_slice %6 {offsets = [2, 0], sizes = [16, 32], strides = [1, 1]} : vector<20x32xf32> to vector<16x32xf32>
    %10 = vector.extract_strided_slice %6 {offsets = [3, 0], sizes = [16, 32], strides = [1, 1]} : vector<20x32xf32> to vector<16x32xf32>
    %11 = vector.extract_strided_slice %6 {offsets = [4, 0], sizes = [16, 32], strides = [1, 1]} : vector<20x32xf32> to vector<16x32xf32>
    %12 = tpu.concatenate %7, %8, %9, %10, %11 in 1 : vector<16x32xf32>, vector<16x32xf32>, vector<16x32xf32>, vector<16x32xf32>, vector<16x32xf32> -> vector<16x160xf32>
    %c0_1 = arith.constant 0 : index
    %c0_2 = arith.constant 0 : index
    %13 = vector.load %arg3[%c0_1, %c0_2] : memref<160x32xf32, #tpu.memory_space<vmem>>, vector<160x32xf32>
    %cst = arith.constant dense<0.000000e+00> : vector<16x32xf32>
    %14 = tpu.matmul %12, %13, %cst {dimension_numbers = #tpu.dot_dimension_numbers<[1], [0], [0], [1], [0, 0, 1, 1], [], []>} : vector<16x160xf32>, vector<160x32xf32>, vector<16x32xf32> -> vector<16x32xf32>
    %c0_3 = arith.constant 0 : index
    %c0_4 = arith.constant 0 : index
    %15 = vector.load %arg4[%c0_3, %c0_4] : memref<1x32xf32, #tpu.memory_space<vmem>>, vector<1x32xf32>
    %16 = vector.broadcast %15 : vector<1x32xf32> to vector<16x32xf32>
    %17 = arith.addf %14, %16 : vector<16x32xf32>
    %c0_5 = arith.constant 0 : index
    %c0_6 = arith.constant 0 : index
    %c0_7 = arith.constant 0 : index
    %18 = vector.load %arg5[%c0_5, %c0_6, %c0_7] : memref<1x16x32xf32, #tpu.memory_space<vmem>>, vector<1x16x32xf32>
    %19 = vector.shape_cast %18 : vector<1x16x32xf32> to vector<16x32xf32>
    %20 = vector.shape_cast %17 : vector<16x32xf32> to vector<1x16x32xf32>
    tpu.vector_store %arg5[%c0_5, %c0_6, %c0_7], %20 {strides = array<i32>} : memref<1x16x32xf32, #tpu.memory_space<vmem>>, vector<1x16x32xf32>,
    return
  }
  func.func @transform_0(%arg0: i32, %arg1: i32) -> (i32, i32, i32) {
    %c0_i32 = arith.constant 0 : i32
    %c0_i32_0 = arith.constant 0 : i32
    %c0_i32_1 = arith.constant 0 : i32
    return %arg0, %c0_i32, %c0_i32_0 : i32, i32, i32
  }
  func.func @transform_1(%arg0: i32, %arg1: i32) -> (i32, i32) {
    %c0_i32 = arith.constant 0 : i32
    %c0_i32_0 = arith.constant 0 : i32
    %c0_i32_1 = arith.constant 0 : i32
    return %c0_i32, %c0_i32_0 : i32, i32
  }
  func.func @transform_2(%arg0: i32, %arg1: i32) -> (i32, i32) {
    %c0_i32 = arith.constant 0 : i32
    %c0_i32_0 = arith.constant 0 : i32
    %c0_i32_1 = arith.constant 0 : i32
    return %c0_i32, %c0_i32_0 : i32, i32
  }
  func.func @transform_3(%arg0: i32, %arg1: i32) -> (i32, i32, i32) {
    %c0_i32 = arith.constant 0 : i32
    %c0_i32_0 = arith.constant 0 : i32
    return %arg0, %arg1, %c0_i32 : i32, i32, i32
  }
}

</mosaic_0001>

<llo_original>
// kernel: tpu_custom_call.1
$region0: #{tpu_custom_call.1}
  #allocation0 [shape = 'u32[]', space=smem, size = 0x4, offset = 0x4, fixed_abs, tag = 'smem constant byte address 0x4 - core index']
  #allocation1 [shape = 'u32[144,128]{1,0:T(1,128)}', space=vmem, size = 0x12000, scoped, tag = 'internal scratch']
  #allocation2 [shape = 'f32[20,32]{1,0:T(8,128)}', space=vmem, size = 0x3000, scoped, tag = 'scratch operand']
  %s0 = inlined_call_operand.vmem [shape: f32[2,16,32], index: 0, kind: input, shape index: {}]
  %s1 = inlined_call_operand.vmem [shape: f32[160,32], index: 1, kind: input, shape index: {}]
  %s2 = inlined_call_operand.vmem [shape: f32[1,32], index: 2, kind: input, shape index: {}]
  %s3 = inlined_call_operand.hbm [shape: f32[2,16,32], index: 3, kind: output, shape index: {}]
  %s4 = sld [smem:[#allocation0]]
  $region49: #{tpu_custom_call.1} parent=0
    _
  %s6 = ssub.s32 1, %s4
  %s7 = scalar_select 0, %s6, %s4
  $region1: #{tpu_custom_call.1} parent=0
    #allocation3 [shape = 'u8[16384]{0}', space=vmem, size = 0x4000, scoped, tag = 'output window, operand 0']
    #allocation4 [shape = 's32[2]{0}', space=sflag, size = 0x8, scoped, tag = 'scoped memory for tpu_custom_call.1']
    %8 = vsyncpa [#allocation4], 0
    %s9 = scalar_lea.sflag [#allocation4], 1
    %10 = vsyncpa %s9, 0
    loop: start=0, step=1, limit=4
    $region2: #{tpu_custom_call.1} parent=1 // loop_pre_header
      _
    $region3: #{tpu_custom_call.1} parent=1 // loop_header
      %s12 = sphi 0, %s16
      %p13 = scmp.ge.s32.totalorder %s12, 4
      %s19 = sphi 0, %s31
      %s20 = sphi 0, %s27
      %s21 = sphi 0, %s19
      %s22 = sphi 0, %s20
      %s23 = sphi 0, %s21
      %s24 = sphi 0, %s22
      %s34 = sphi 0, %s36
      %s37 = sphi 0, %s34
      %s38 = sphi 0, %s37
      %s54 = sphi 0, %s38
      %s58 = sphi 0, %s58
      %s60 = sphi 0, %s58
      %s61 = sphi 0, %s60
      %s75 = sphi 0, %s61
      %s79 = sphi 0, %s79
      %s81 = sphi 0, %s79
      %s82 = sphi 0, %s81
      %s96 = sphi 0, %s82
      %s104 = sphi 0, %s106
      %s107 = sphi 0, %s104
      %s108 = sphi 0, %s107
      %s124 = sphi 0, %s108
    $region4: #{tpu_custom_call.1} parent=1 // loop_header_branch
      %15 = sbr.rel (%p13) target = $region8
    $region5: #{tpu_custom_call.1} parent=1 // loop_body
      %s17 = ssub.s32 %s12, 1
      %s18 = ssub.s32 %s12, 2
      %s25 = sadd.s32 1, %s20
      %p26 = scmp.ge.s32.totalorder %s25, 1
      %s27 = scalar_select %p26, 0, %s25
      %s28 = sadd.s32 1, %s19
      %s29 = scalar_select %p26, %s28, %s19
      %p30 = scmp.ge.s32.totalorder %s29, 2
      %s31 = scalar_select %p30, 0, %s29
      %s32 = ssub.s32 %s19, %s31
      %p33 = scmp.eq.s32.totalorder %s32, 0
      %s35 = sadd.s32 %s34, 1
      %s36 = scalar_select %p33, %s34, %s35
      %p39 = pneg %p33
      %p40 = scmp.eq.s32.totalorder %s12, 1
      %p41 = por %p39, %p40
      %p42 = scmp.ne.s32.totalorder %s34, %s37
      %p43 = scmp.eq.s32.totalorder %s12, 0
      %p44 = por %p42, %p43
      %p45 = scmp.ne.s32.totalorder %s34, %s37
      %p46 = scmp.eq.s32.totalorder %s17, 1
      %p47 = por %p45, %p46
      %p48 = scmp.ne.s32.totalorder %s37, %s38
      %p49 = scmp.eq.s32.totalorder %s17, 0
      %p50 = por %p48, %p49
      %p51 = scmp.ne.s32.totalorder %s37, %s38
      %p52 = scmp.eq.s32.totalorder %s18, 1
      %p53 = por %p51, %p52
      %p55 = scmp.ne.s32.totalorder %s38, %s54
      %p56 = scmp.eq.s32.totalorder %s18, 0
      %p57 = por %p55, %p56
      %s59 = sadd.s32 %s58, 1
      %p62 = scmp.eq.s32.totalorder %s12, 1
      %p63 = scmp.ne.s32.totalorder %s58, %s60
      %p64 = scmp.eq.s32.totalorder %s12, 0
      %p65 = por %p63, %p64
      %p66 = scmp.ne.s32.totalorder %s58, %s60
      %p67 = scmp.eq.s32.totalorder %s17, 1
      %p68 = por %p66, %p67
      %p69 = scmp.ne.s32.totalorder %s60, %s61
      %p70 = scmp.eq.s32.totalorder %s17, 0
      %p71 = por %p69, %p70
      %p72 = scmp.ne.s32.totalorder %s60, %s61
      %p73 = scmp.eq.s32.totalorder %s18, 1
      %p74 = por %p72, %p73
      %p76 = scmp.ne.s32.totalorder %s61, %s75
      %p77 = scmp.eq.s32.totalorder %s18, 0
      %p78 = por %p76, %p77
      %s80 = sadd.s32 %s79, 1
      %p83 = scmp.eq.s32.totalorder %s12, 1
      %p84 = scmp.ne.s32.totalorder %s79, %s81
      %p85 = scmp.eq.s32.totalorder %s12, 0
      %p86 = por %p84, %p85
      %p87 = scmp.ne.s32.totalorder %s79, %s81
      %p88 = scmp.eq.s32.totalorder %s17, 1
      %p89 = por %p87, %p88
      %p90 = scmp.ne.s32.totalorder %s81, %s82
      %p91 = scmp.eq.s32.totalorder %s17, 0
      %p92 = por %p90, %p91
      %p93 = scmp.ne.s32.totalorder %s81, %s82
      %p94 = scmp.eq.s32.totalorder %s18, 1
      %p95 = por %p93, %p94
      %p97 = scmp.ne.s32.totalorder %s82, %s96
      %p98 = scmp.eq.s32.totalorder %s18, 0
      %p99 = por %p97, %p98
      %s100 = ssub.s32 %s19, %s31
      %s101 = ssub.s32 %s20, %s27
      %s102 = sor.u32 %s100, %s101
      %p103 = scmp.eq.s32.totalorder %s102, 0
      %s105 = sadd.s32 %s104, 1
      %s106 = scalar_select %p103, %s104, %s105
      %p109 = pneg %p103
      %p110 = scmp.eq.s32.totalorder %s12, 1
      %p111 = por %p109, %p110
      %p112 = scmp.ne.s32.totalorder %s104, %s107
      %p113 = scmp.eq.s32.totalorder %s12, 0
      %p114 = por %p112, %p113
      %p115 = scmp.ne.s32.totalorder %s104, %s107
      %p116 = scmp.eq.s32.totalorder %s17, 1
      %p117 = por %p115, %p116
      %p118 = scmp.ne.s32.totalorder %s107, %s108
      %p119 = scmp.eq.s32.totalorder %s17, 0
      %p120 = por %p118, %p119
      %p121 = scmp.ne.s32.totalorder %s107, %s108
      %p122 = scmp.eq.s32.totalorder %s18, 1
      %p123 = por %p121, %p122
      %p125 = scmp.ne.s32.totalorder %s108, %s124
      %p126 = scmp.eq.s32.totalorder %s18, 0
      %p127 = por %p125, %p126
      %p128 = scmp.le.s32.totalorder 1, %s12
      %p129 = scmp.lt.s32.totalorder %s12, 3
      %p130 = pnand %p128, %p129
      %p131 = pneg %p130
      // Predicated region
      $region9: #{tpu_custom_call.1} parent=5 // pred_check
        _
      $region10: #{tpu_custom_call.1} parent=5 // pred_check_branch
        %133 = sbr.rel (%p130) target = $region12
      $region11: #{tpu_custom_call.1} parent=5 // pred_region
        %s134 = ssub.s32 %s12, 1
        // Predicated region
        $region13: #{tpu_custom_call.1} parent=11 // pred_check
          %p135 = pneg %p71
        $region14: #{tpu_custom_call.1} parent=11 // pred_check_branch
          %137 = sbr.rel (%p135) target = $region16
        $region15: #{tpu_custom_call.1} parent=11 // pred_region
          _
        $region16: #{tpu_custom_call.1} parent=11 // pred_fallthru
          _
        // Predicated region
        $region17: #{tpu_custom_call.1} parent=11 // pred_check
          %p138 = pneg %p92
        $region18: #{tpu_custom_call.1} parent=11 // pred_check_branch
          %140 = sbr.rel (%p138) target = $region20
        $region19: #{tpu_custom_call.1} parent=11 // pred_region
          _
        $region20: #{tpu_custom_call.1} parent=11 // pred_fallthru
          _
      $region12: #{tpu_custom_call.1} parent=5 // pred_fallthru
        _
      %p141 = scmp.lt.s32.totalorder %s12, 2
      // Predicated region
      $region21: #{tpu_custom_call.1} parent=5 // pred_check
        %p142 = pneg %p141
      $region22: #{tpu_custom_call.1} parent=5 // pred_check_branch
        %144 = sbr.rel (%p142) target = $region24
      $region23: #{tpu_custom_call.1} parent=5 // pred_region
        // Predicated region
        $region25: #{tpu_custom_call.1} parent=23 // pred_check
          %p145 = pneg %p44
        $region26: #{tpu_custom_call.1} parent=23 // pred_check_branch
          %147 = sbr.rel (%p145) target = $region28
        $region27: #{tpu_custom_call.1} parent=23 // pred_region
          %p148 = scmp.lt.s32.totalorder %s19, 1
          %s149 = scalar_select %p148, %s19, 1
          %s150 = smul.addr %s149, 2
          %s151 = smul.addr %s150, 8
          %s152 = scalar_lea.vmem %s0, %s151
        $region28: #{tpu_custom_call.1} parent=23 // pred_fallthru
          _
      $region24: #{tpu_custom_call.1} parent=5 // pred_fallthru
        _
      %p153 = scmp.le.s32.totalorder 1, %s12
      %p154 = scmp.lt.s32.totalorder %s12, 3
      %p155 = pnand %p153, %p154
      %p156 = pneg %p155
      // Predicated region
      $region29: #{tpu_custom_call.1} parent=5 // pred_check
        _
      $region30: #{tpu_custom_call.1} parent=5 // pred_check_branch
        %158 = sbr.rel (%p155) target = $region32
      $region31: #{tpu_custom_call.1} parent=5 // pred_region
        %s159 = ssub.s32 %s12, 1
        %p160 = scmp.lt.s32.totalorder %s21, 1
        %s161 = scalar_select %p160, %s21, 1
        %s162 = smul.addr %s161, 2
        %s163 = smul.addr %s162, 8
        %s164 = scalar_lea.vmem %s0, %s163
        %p165 = pneg %p50
        %p166 = pneg %p47
        %p167 = pneg %p71
        %p168 = pneg %p68
        %p169 = pneg %p92
        %p170 = pneg %p89
        %p171 = pneg %p120
        %p172 = pneg %p117
        %s173 = sand.u32 %s107, 1
        %s174 = scalar_lea.sflag [#allocation4], %s173
        %s175 = sand.u32 %s107, 1
        %s176 = smul.addr %s175, 16
        %s177 = scalar_lea.vmem [#allocation3], %s176
        %p178 = scmp.lt.s32.totalorder %s21, 1
        %s179 = scalar_select %p178, %s21, 1
        %s180 = smul.addr %s179, 2
        %s181 = smul.addr %s180, 8
        %s182 = scalar_lea.vmem %s0, %s181
        %s183 = smul.u32 2, %s22
        %p184 = scmp.eq.s32.totalorder %s22, 0
        // Predicated region
        $region33: #{tpu_custom_call.1} parent=31 // pred_check
          %p185 = pneg %p184
        $region34: #{tpu_custom_call.1} parent=31 // pred_check_branch
          %187 = sbr.rel (%p185) target = $region36
        $region35: #{tpu_custom_call.1} parent=31 // pred_region
          %vm188 = vcmask 254976
          %189 = vst.msk [vmem:[#allocation2] sm:$0x3] %vm188, 0.0
          %190 = vst.msk [vmem:[#allocation2 + $0x12] sm:$0x3] %vm188, 0.0
          %v191 = vld [vmem:[%s182] sm:$0xff]
          %v192 = vld [vmem:[%s182 + $0x8] sm:$0xff]
          %vm193 = vcmask 261120
          %194 = vst.msk [vmem:[#allocation2 + $0x2] sm:$0xff] %vm193, %v191
          %195 = vst.msk [vmem:[#allocation2 + $0xa] sm:$0xff] %vm193, %v192
        $region36: #{tpu_custom_call.1} parent=31 // pred_fallthru
          _
        %s196 = smul.u32 %s22, 16
        %s197 = scalar_lea.vmem [#allocation2], %s196
        %v198 = vld [vmem:[%s197] sm:$0xff]
        %v199 = vld [vmem:[%s197 + $0x8] sm:$0xff]
        %v200 = vld [vmem:[%s197 + $0x10] sm:$0xf]
        %vm204 = vcmask 1046528
        %v205 = vrot.slane %v198, 1
        %v206 = vrot.slane %v199, 1
        %v207 = vsel %vm204, %v205, %v206
        %v208 = vrot.slane %v200, 1
        %v209 = vsel %vm204, %v206, %v208
        %210 = vrot.lane.b32.xlu0 %v207, 32
        %v211 = vpop.permute.xlu0 %210
        %212 = vrot.lane.b32.xlu0 %v209, 32
        %v213 = vpop.permute.xlu0 %212
        %vm216 = vcmask 1045504
        %v217 = vrot.slane %v198, 2
        %v218 = vrot.slane %v199, 2
        %v219 = vsel %vm216, %v217, %v218
        %v220 = vrot.slane %v200, 2
        %v221 = vsel %vm216, %v218, %v220
        %222 = vrot.lane.b32.xlu0 %v219, 64
        %v223 = vpop.permute.xlu0 %222
        %224 = vrot.lane.b32.xlu0 %v221, 64
        %v225 = vpop.permute.xlu0 %224
        %vm228 = vcmask 1044480
        %v229 = vrot.slane %v198, 3
        %v230 = vrot.slane %v199, 3
        %v231 = vsel %vm228, %v229, %v230
        %v232 = vrot.slane %v200, 3
        %v233 = vsel %vm228, %v230, %v232
        %234 = vrot.lane.b32.xlu0 %v231, 96
        %v235 = vpop.permute.xlu0 %234
        %236 = vrot.lane.b32.xlu0 %v233, 96
        %v237 = vpop.permute.xlu0 %236
        %vm240 = vcmask 1043456
        %v241 = vrot.slane %v198, 4
        %v242 = vrot.slane %v199, 4
        %v243 = vsel %vm240, %v241, %v242
        %v244 = vrot.slane %v200, 4
        %v245 = vsel %vm240, %v242, %v244
        %vm246 = vcmask 261120
        %v247 = vsel %vm246, %v198, %v211
        %v248 = vsel %vm246, %v199, %v213
        %vm249 = vcmask 523264
        %v250 = vsel %vm249, %v247, %v223
        %v251 = vsel %vm249, %v248, %v225
        %vm252 = vcmask 785408
        %v253 = vsel %vm252, %v250, %v235
        %v254 = vsel %vm252, %v251, %v237
        %v255 = vld [vmem:[%s1] sm:$0xff]
        %v256 = vld [vmem:[%s1 + $0x8] sm:$0xff]
        %v257 = vld [vmem:[%s1 + $0x10] sm:$0xff]
        %v258 = vld [vmem:[%s1 + $0x18] sm:$0xff]
        %v259 = vld [vmem:[%s1 + $0x20] sm:$0xff]
        %v260 = vld [vmem:[%s1 + $0x28] sm:$0xff]
        %v261 = vld [vmem:[%s1 + $0x30] sm:$0xff]
        %v262 = vld [vmem:[%s1 + $0x38] sm:$0xff]
        %v263 = vld [vmem:[%s1 + $0x40] sm:$0xff]
        %v264 = vld [vmem:[%s1 + $0x48] sm:$0xff]
        %v265 = vld [vmem:[%s1 + $0x50] sm:$0xff]
        %v266 = vld [vmem:[%s1 + $0x58] sm:$0xff]
        %v267 = vld [vmem:[%s1 + $0x60] sm:$0xff]
        %v268 = vld [vmem:[%s1 + $0x68] sm:$0xff]
        %v269 = vld [vmem:[%s1 + $0x70] sm:$0xff]
        %v270 = vld [vmem:[%s1 + $0x78] sm:$0xff]
        %v271 = vld [vmem:[%s1 + $0x80] sm:$0xff]
        %v272 = vld [vmem:[%s1 + $0x88] sm:$0xff]
        %v273 = vld [vmem:[%s1 + $0x90] sm:$0xff]
        %v274 = vld [vmem:[%s1 + $0x98] sm:$0xff]
        %v275 = vld [vmem:[%s2] sm:$0x1]
        %v277 = vlaneseq
        %v278 = vshrl.u32 %v277, 7
        %v279 = vsub.s32 0, %v278
        %v280 = vrot.slane %v275, %v279
        %v282 = vsel %vm246, %v243, 0
        %v284 = vsel %vm246, %v245, 0
        %286 = vmatprep.subr.mxu0 0.0
        %287 = vmatpush1.msra.mxu0 %v270
        %288 = vmatprep.subr.mxu0 0.0
        %289 = vmatpush1.msra.mxu0 %v269
        %290 = vmatprep.subr.mxu0 0.0
        %291 = vmatpush1.msra.mxu0 %v268
        %292 = vmatprep.subr.mxu0 0.0
        %293 = vmatpush1.msra.mxu0 %v267
        %294 = vmatprep.subr.mxu0 0.0
        %295 = vmatpush1.msra.mxu0 %v266
        %296 = vmatprep.subr.mxu0 0.0
        %297 = vmatpush1.msra.mxu0 %v265
        %298 = vmatprep.subr.mxu0 0.0
        %299 = vmatpush1.msra.mxu0 %v264
        %300 = vmatprep.subr.mxu0 0.0
        %301 = vmatpush1.msra.mxu0 %v263
        %302 = vmatprep.subr.mxu0 0.0
        %303 = vmatpush1.msra.mxu0 %v262
        %304 = vmatprep.subr.mxu0 0.0
        %305 = vmatpush1.msra.mxu0 %v261
        %306 = vmatprep.subr.mxu0 0.0
        %307 = vmatpush1.msra.mxu0 %v260
        %308 = vmatprep.subr.mxu0 0.0
        %309 = vmatpush1.msra.mxu0 %v259
        %310 = vmatprep.subr.mxu0 0.0
        %311 = vmatpush1.msra.mxu0 %v258
        %312 = vmatprep.subr.mxu0 0.0
        %313 = vmatpush1.msra.mxu0 %v257
        %314 = vmatprep.subr.mxu0 0.0
        %315 = vmatpush1.msra.mxu0 %v256
        %316 = vmatprep.subr.mxu0 0.0
        %317 = vmatpush1.msra.mxu0 %v255
        %318 = vmatprep.subr.mxu0 0.0
        %319 = vmatpush2.msra.mxu0 0.0
        %320 = vmatprep.subr.mxu0 0.0
        %321 = vmatpush2.msra.mxu0 0.0
        %322 = vmatprep.subr.mxu0 0.0
        %323 = vmatpush2.msra.mxu0 0.0
        %324 = vmatprep.subr.mxu0 0.0
        %325 = vmatpush2.msra.mxu0 0.0
        %326 = vmatprep.subr.mxu0 0.0
        %327 = vmatpush2.msra.mxu0 0.0
        %328 = vmatprep.subr.mxu0 0.0
        %329 = vmatpush2.msra.mxu0 0.0
        %330 = vmatprep.subr.mxu0 0.0
        %331 = vmatpush2.msra.mxu0 0.0
        %332 = vmatprep.subr.mxu0 0.0
        %333 = vmatpush2.msra.mxu0 0.0
        %334 = vmatprep.subr.mxu0 0.0
        %335 = vmatpush2.msra.mxu0 0.0
        %336 = vmatprep.subr.mxu0 0.0
        %337 = vmatpush2.msra.mxu0 0.0
        %338 = vmatprep.subr.mxu0 0.0
        %339 = vmatpush2.msra.mxu0 0.0
        %340 = vmatprep.subr.mxu0 0.0
        %341 = vmatpush2.msra.mxu0 0.0
        %342 = vmatprep.subr.mxu0 0.0
        %343 = vmatpush2.msra.mxu0 %v274
        %344 = vmatprep.subr.mxu0 0.0
        %345 = vmatpush2.msra.mxu0 %v273
        %346 = vmatprep.subr.mxu0 0.0
        %347 = vmatpush2.msra.mxu0 %v272
        %348 = vmatprep.subr.mxu0 0.0
        %349 = vmatpush2.msra.mxu0 %v271
        %350 = vmatprep.mubr.f32.mxu0 %v282
        %351 = vmatmul.mubr.f32.gmra.mxu0 %v253
        %v352 = vpop.f32.mrf.mxu0
        %v353 = vadd.f32 %v280, %v352
        %v354 = vpop.f32.mrf.mxu0
        %355 = vmatprep.mubr.f32.mxu0 %v284
        %356 = vmatmul.mubr.f32.gmra.mxu0 %v254
        %v357 = vpop.f32.mrf.mxu0
        %v358 = vadd.f32 %v280, %v357
        %v359 = vpop.f32.mrf.mxu0
        %360 = vdwg.mxu0
        %361 = vst.msk [vmem:[%s177] sm:$0xff] %vm246, %v353
        %362 = vst.msk [vmem:[%s177 + $0x8] sm:$0xff] %vm246, %v358
        %s363 = sand.u32 %s107, 1
        %s364 = scalar_lea.sflag [#allocation4], %s363
        %s365 = sand.u32 %s107, 1
        %s366 = smul.addr %s365, 16
        %s367 = scalar_lea.vmem [#allocation3], %s366
        // Predicated region
        $region37: #{tpu_custom_call.1} parent=31 // pred_check
          %p368 = pneg %p117
        $region38: #{tpu_custom_call.1} parent=31 // pred_check_branch
          %370 = sbr.rel (%p368) target = $region40
        $region39: #{tpu_custom_call.1} parent=31 // pred_region
          %s371 = smul.u32 2, %s22
          %s373 = ssub.s32 256, 256
          %374 = vsyncadd %s364, %s373
          %s375 = smul.addr %s21, 2
          %s376 = sadd.s32 %s371, %s375
          %s377 = smul.addr %s376, 128
          %s378 = scalar_lea.hbm %s3, %s377
          %s379 = sshll.u32 %s367, 4
          %s380 = int_to_ptr.vmem [resolvable:$true] %s379
          %385 = dma.vmem_to_hbm [thread:$0]  %s380, 256, %s378, %s364, 128, 128, 8
        $region40: #{tpu_custom_call.1} parent=31 // pred_fallthru
          _
      $region32: #{tpu_custom_call.1} parent=5 // pred_fallthru
        _
      %p386 = scmp.le.s32.totalorder 2, %s12
      // Predicated region
      $region41: #{tpu_custom_call.1} parent=5 // pred_check
        %p387 = pneg %p386
      $region42: #{tpu_custom_call.1} parent=5 // pred_check_branch
        %389 = sbr.rel (%p387) target = $region44
      $region43: #{tpu_custom_call.1} parent=5 // pred_region
        %s390 = ssub.s32 %s12, 2
        // Predicated region
        $region45: #{tpu_custom_call.1} parent=43 // pred_check
          %p391 = pneg %p123
        $region46: #{tpu_custom_call.1} parent=43 // pred_check_branch
          %393 = sbr.rel (%p391) target = $region48
        $region47: #{tpu_custom_call.1} parent=43 // pred_region
          %s394 = sand.u32 %s108, 1
          %s395 = scalar_lea.sflag [#allocation4], %s394
          %s396 = sand.u32 %s108, 1
          %s397 = smul.addr %s396, 16
          %s398 = scalar_lea.vmem [#allocation3], %s397
          %399 = dma.done %s395, 256
        $region48: #{tpu_custom_call.1} parent=43 // pred_fallthru
          _
      $region44: #{tpu_custom_call.1} parent=5 // pred_fallthru
        _
    $region6: #{tpu_custom_call.1} parent=1 // loop_footer
      %s16 = sadd.s32 1, %s12
    $region7: #{tpu_custom_call.1} parent=1 // loop_footer_branch
      %11 = sbr.rel target = $region3
    $region8: #{tpu_custom_call.1} parent=1 // loop_exit
      _
    %400 = vsyncpa [#allocation4], 1
    %s401 = scalar_lea.sflag [#allocation4], 1
    %402 = vsyncpa %s401, 1

</llo_original>
